<compile_context>
chip_gen: v6e
topology: v6e:2x2x1
jax: 0.10.0
libtpu: 0.0.40
codegen_flags: <defaults>
</compile_context>

<pallas_src>
import functools
import math

import jax
import jax.numpy as jnp
from jax.experimental import pallas as pl
from jax.experimental.pallas import tpu as pltpu


_LANE = 128
_SUBLANE = 8


def _vmem_capacity_bytes():
    """Physical VMEM of the local TPU; conservative (v7x-sized) fallback."""
    try:
        return int(pltpu.get_tpu_info().vmem_capacity_bytes)
    except Exception:
        return 64 * 1024 * 1024


def _color_process_kernel(d_ref, bias_ref, img_ref, out_ref, *, curve_steps):
    """Apply the telescoped color curve to one lane-dense (rows, tile) slab.

    d_ref:    (rows, S) f32 difference weights  d_0 = w'_0, d_i = w'_i - w'_{i-1}
    bias_ref: (rows, 1) f32 folded constants    b = -sum_{i>=1} d_i * (i/S)
    img_ref / out_ref: (rows, tile) spatial tile (rows = packed (batch, channel)).
    """
    x = img_ref[...].astype(jnp.float32)
    # One-time saturation clamp replaces every per-step upper clip.
    xc = jnp.clip(x, 0.0, 1.0)
    d = d_ref[...]                                        # (rows, S), resident
    # i = 0 term: lo_0 == 0 so max() is the identity on the clamped value.
    acc = bias_ref[...] + d[:, 0:1] * xc
    for i in range(1, curve_steps):                       # static unroll
        lo = float(i) / float(curve_steps)                # same rounding as wrapper
        # Hot loop body is max + mul + add only (lane-broadcast of the per-row
        # scalar d_i is hoisted by the unroll; 8 broadcasts per tile total).
        acc = acc + d[:, i:i + 1] * jnp.maximum(xc, lo)
    out_ref[...] = acc.astype(out_ref.dtype)


def color_process(img, param, defog_A, IcA, *, curve_steps, color_curve_range=(0.90, 1.10)):
    """Pallas implementation of ColorProcess.forward.

    img:     (B, C, H, W) float32
    param:   (B, C, 1, 1, curve_steps) float32   (the color curve)
    defog_A: unused (interface parity)
    IcA:     unused (interface parity)
    """
    del defog_A, IcA, color_curve_range  # unused by the reference forward pass
    B, C, H, W = img.shape
    S = int(curve_steps)
    R = B * C
    N = H * W

    # --- fold normalization + telescope into difference weights + bias (tiny) ---
    curve = param.reshape(R, S).astype(jnp.float32)
    curve_sum = jnp.sum(curve, axis=1, keepdims=True) + 1e-30
    w = curve * (float(S) / curve_sum)                                   # (R, S)
    d = w - jnp.concatenate([jnp.zeros((R, 1), jnp.float32), w[:, :-1]], axis=1)
    lo_consts = jnp.asarray([float(i) / float(S) for i in range(S)], dtype=jnp.float32)
    bias = -jnp.sum(d * lo_consts[None, :], axis=1, keepdims=True)       # (R, 1)

    # --- sublane packing: rows must be a multiple of 8 for full vreg use ---
    k = 1 if R % _SUBLANE == 0 else _SUBLANE // math.gcd(R, _SUBLANE)
    rows = R * k
    if k > 1:
        d = jnp.repeat(d, k, axis=0)
        bias = jnp.repeat(bias, k, axis=0)

    # --- generation-aware lane-dense tiling of the packed (rows, cols) slab ---
    bpe = max(jnp.dtype(img.dtype).itemsize, 4)          # f32 compute inside
    col_align = _LANE * k
    packed_min = ((N + col_align - 1) // col_align) * _LANE   # lane-aligned packed width

    vmem_cap = _vmem_capacity_bytes()
    small_vmem = vmem_cap <= 64 * 1024 * 1024            # v7x-class
    target_block = (3 if small_vmem else 8) * 1024 * 1024
    max_tile = max(_LANE, (target_block // (rows * bpe)) // _LANE * _LANE)
    tile = min(max_tile, packed_min)
    # Guarantee >=2 tiles when the width allows, so both v7x TensorCores get work.
    if tile >= packed_min and packed_min >= 2 * _LANE:
        tile = max(_LANE, (packed_min // 2) // _LANE * _LANE)
    grid_n = (packed_min + tile - 1) // tile
    packed_cols = grid_n * tile                           # pad width up to the tile
    flat_cols = packed_cols * k

    x = img.reshape(R, N)
    if flat_cols != N:
        x = jnp.pad(x, ((0, 0), (0, flat_cols - N)))
    x = x.reshape(rows, packed_cols)

    block_bytes = rows * tile * bpe
    vmem_limit = max(6 * block_bytes + (8 << 20), 16 << 20)
    vmem_limit = int(min(vmem_limit, (32 << 20) if small_vmem else (64 << 20)))

    kernel = functools.partial(_color_process_kernel, curve_steps=S)

    out = pl.pallas_call(
        kernel,
        out_shape=jax.ShapeDtypeStruct((rows, packed_cols), img.dtype),
        grid_spec=pl.GridSpec(
            grid=(grid_n,),
            in_specs=[
                pl.BlockSpec((rows, S), lambda j: (0, 0)),     # weights: resident
                pl.BlockSpec((rows, 1), lambda j: (0, 0)),     # bias: resident
                pl.BlockSpec((rows, tile), lambda j: (0, j)),  # lane-dense image tile
            ],
            out_specs=pl.BlockSpec((rows, tile), lambda j: (0, j)),
        ),
        compiler_params=pltpu.CompilerParams(
            dimension_semantics=("parallel",),
            vmem_limit_bytes=vmem_limit,
        ),
    )(d, bias, x)

    out = out.reshape(R, flat_cols)
    if flat_cols != N:
        out = out[:, :N]
    return out.reshape(B, C, H, W)


def _color_process_ref(img, param, curve_steps):
    """Pure-JAX reference mirroring the PyTorch forward."""
    curve = param                                    # (B, C, 1, 1, S)
    curve_sum = jnp.sum(curve, axis=4, keepdims=True) + 1e-30
    total = jnp.zeros_like(img)
    for i in range(curve_steps):
        clip_min = 1.0 * i / curve_steps
        clip_max = 1.0 / curve_steps
        clipped = jnp.clip(img - clip_min, 0.0, clip_max)
        total = total + clipped * curve[:, :, :, :, i]
    multiplier = curve_steps / jnp.squeeze(curve_sum, axis=4)  # (B, C, 1, 1)
    return total * multiplier


if __name__ == "__main__":
    CURVE_STEPS = 8
    COLOR_CURVE_RANGE = (0.90, 1.10)

    key = jax.random.PRNGKey(0)
    ok = True
    # Cases: primary small (sublane-packing path, R=6), lane-padding path,
    # R%8==0 + forced 2-tile split path, and a larger multi-tile image.
    for (B, C, H, W) in [(2, 3, 16, 16), (2, 3, 16, 20), (2, 4, 64, 96), (2, 3, 256, 384)]:
        key, k_img, k_param, k_A, k_IcA = jax.random.split(key, 5)
        img = jax.random.uniform(k_img, (B, C, H, W), dtype=jnp.float32)
        param = jax.random.uniform(
            k_param, (B, C, 1, 1, CURVE_STEPS), dtype=jnp.float32,
            minval=COLOR_CURVE_RANGE[0], maxval=COLOR_CURVE_RANGE[1],
        )
        defog_A = jax.random.uniform(k_A, (B, C), dtype=jnp.float32)       # unused
        IcA = jax.random.uniform(k_IcA, (B, 1, H, W), dtype=jnp.float32)   # unused

        out = color_process(img, param, defog_A, IcA,
                            curve_steps=CURVE_STEPS,
                            color_curve_range=COLOR_CURVE_RANGE)
        out = jax.block_until_ready(out)

        ref = _color_process_ref(img, param, CURVE_STEPS)
        case_ok = (out.shape == (B, C, H, W)) and bool(
            jnp.allclose(out, ref, atol=1e-5, rtol=1e-5))
        if not case_ok:
            print("MISMATCH", (B, C, H, W),
                  float(jnp.max(jnp.abs(out - ref))))
        ok = ok and case_ok

    if ok:
        print("KERNEL_OK")
</pallas_src>

<mosaic_0001>
module attributes {stable_mosaic.version = 11 : i64} {
  func.func @_color_process_kernel(%arg0: i32, %arg1: memref<24x8xf32, #tpu.memory_space<vmem>>, %arg2: memref<24x1xf32, #tpu.memory_space<vmem>>, %arg3: memref<24x128xf32, #tpu.memory_space<vmem>>, %arg4: memref<24x128xf32, #tpu.memory_space<vmem>>) attributes {dimension_semantics = [#tpu.dimension_semantics<parallel>], iteration_bounds = array<i64: 1>, scalar_prefetch = 0 : i64, scratch_operands = 0 : i64, tpu.core_type = #tpu.core_type<tc>, window_params = [{pipeline_mode = #tpu.pipeline_mode<synchronous>, transform_indices = @transform_0, window_bounds = array<i64: 24, 8>}, {pipeline_mode = #tpu.pipeline_mode<synchronous>, transform_indices = @transform_1, window_bounds = array<i64: 24, 1>}, {transform_indices = @transform_2, window_bounds = array<i64: 24, 128>}, {transform_indices = @transform_3, window_bounds = array<i64: 24, 128>}]} {
    %c0 = arith.constant 0 : index
    %c0_0 = arith.constant 0 : index
    %0 = vector.load %arg3[%c0, %c0_0] : memref<24x128xf32, #tpu.memory_space<vmem>>, vector<24x128xf32>
    %cst = arith.constant 0.000000e+00 : f32
    %cst_1 = arith.constant 1.000000e+00 : f32
    %1 = vector.broadcast %cst : f32 to vector<24x128xf32>
    %2 = arith.maximumf %1, %0 : vector<24x128xf32>
    %3 = vector.broadcast %cst_1 : f32 to vector<24x128xf32>
    %4 = arith.minimumf %3, %2 : vector<24x128xf32>
    %c0_2 = arith.constant 0 : index
    %c0_3 = arith.constant 0 : index
    %5 = vector.load %arg1[%c0_2, %c0_3] : memref<24x8xf32, #tpu.memory_space<vmem>>, vector<24x8xf32>
    %c0_4 = arith.constant 0 : index
    %c0_5 = arith.constant 0 : index
    %6 = vector.load %arg2[%c0_4, %c0_5] : memref<24x1xf32, #tpu.memory_space<vmem>>, vector<24x1xf32>
    %7 = vector.extract_strided_slice %5 {offsets = [0, 0], sizes = [24, 1], strides = [1, 1]} : vector<24x8xf32> to vector<24x1xf32>
    %8 = vector.broadcast %7 : vector<24x1xf32> to vector<24x128xf32>
    %9 = arith.mulf %8, %4 : vector<24x128xf32>
    %10 = vector.broadcast %6 : vector<24x1xf32> to vector<24x128xf32>
    %11 = arith.addf %10, %9 : vector<24x128xf32>
    %12 = vector.extract_strided_slice %5 {offsets = [0, 1], sizes = [24, 1], strides = [1, 1]} : vector<24x8xf32> to vector<24x1xf32>
    %cst_6 = arith.constant 1.250000e-01 : f32
    %13 = vector.broadcast %cst_6 : f32 to vector<24x128xf32>
    %14 = arith.maximumf %4, %13 : vector<24x128xf32>
    %15 = vector.broadcast %12 : vector<24x1xf32> to vector<24x128xf32>
    %16 = arith.mulf %15, %14 : vector<24x128xf32>
    %17 = arith.addf %11, %16 : vector<24x128xf32>
    %18 = vector.extract_strided_slice %5 {offsets = [0, 2], sizes = [24, 1], strides = [1, 1]} : vector<24x8xf32> to vector<24x1xf32>
    %cst_7 = arith.constant 2.500000e-01 : f32
    %19 = vector.broadcast %cst_7 : f32 to vector<24x128xf32>
    %20 = arith.maximumf %4, %19 : vector<24x128xf32>
    %21 = vector.broadcast %18 : vector<24x1xf32> to vector<24x128xf32>
    %22 = arith.mulf %21, %20 : vector<24x128xf32>
    %23 = arith.addf %17, %22 : vector<24x128xf32>
    %24 = vector.extract_strided_slice %5 {offsets = [0, 3], sizes = [24, 1], strides = [1, 1]} : vector<24x8xf32> to vector<24x1xf32>
    %cst_8 = arith.constant 3.750000e-01 : f32
    %25 = vector.broadcast %cst_8 : f32 to vector<24x128xf32>
    %26 = arith.maximumf %4, %25 : vector<24x128xf32>
    %27 = vector.broadcast %24 : vector<24x1xf32> to vector<24x128xf32>
    %28 = arith.mulf %27, %26 : vector<24x128xf32>
    %29 = arith.addf %23, %28 : vector<24x128xf32>
    %30 = vector.extract_strided_slice %5 {offsets = [0, 4], sizes = [24, 1], strides = [1, 1]} : vector<24x8xf32> to vector<24x1xf32>
    %cst_9 = arith.constant 5.000000e-01 : f32
    %31 = vector.broadcast %cst_9 : f32 to vector<24x128xf32>
    %32 = arith.maximumf %4, %31 : vector<24x128xf32>
    %33 = vector.broadcast %30 : vector<24x1xf32> to vector<24x128xf32>
    %34 = arith.mulf %33, %32 : vector<24x128xf32>
    %35 = arith.addf %29, %34 : vector<24x128xf32>
    %36 = vector.extract_strided_slice %5 {offsets = [0, 5], sizes = [24, 1], strides = [1, 1]} : vector<24x8xf32> to vector<24x1xf32>
    %cst_10 = arith.constant 6.250000e-01 : f32
    %37 = vector.broadcast %cst_10 : f32 to vector<24x128xf32>
    %38 = arith.maximumf %4, %37 : vector<24x128xf32>
    %39 = vector.broadcast %36 : vector<24x1xf32> to vector<24x128xf32>
    %40 = arith.mulf %39, %38 : vector<24x128xf32>
    %41 = arith.addf %35, %40 : vector<24x128xf32>
    %42 = vector.extract_strided_slice %5 {offsets = [0, 6], sizes = [24, 1], strides = [1, 1]} : vector<24x8xf32> to vector<24x1xf32>
    %cst_11 = arith.constant 7.500000e-01 : f32
    %43 = vector.broadcast %cst_11 : f32 to vector<24x128xf32>
    %44 = arith.maximumf %4, %43 : vector<24x128xf32>
    %45 = vector.broadcast %42 : vector<24x1xf32> to vector<24x128xf32>
    %46 = arith.mulf %45, %44 : vector<24x128xf32>
    %47 = arith.addf %41, %46 : vector<24x128xf32>
    %48 = vector.extract_strided_slice %5 {offsets = [0, 7], sizes = [24, 1], strides = [1, 1]} : vector<24x8xf32> to vector<24x1xf32>
    %cst_12 = arith.constant 8.750000e-01 : f32
    %49 = vector.broadcast %cst_12 : f32 to vector<24x128xf32>
    %50 = arith.maximumf %4, %49 : vector<24x128xf32>
    %51 = vector.broadcast %48 : vector<24x1xf32> to vector<24x128xf32>
    %52 = arith.mulf %51, %50 : vector<24x128xf32>
    %53 = arith.addf %47, %52 : vector<24x128xf32>
    %c0_13 = arith.constant 0 : index
    %c0_14 = arith.constant 0 : index
    %54 = vector.load %arg4[%c0_13, %c0_14] : memref<24x128xf32, #tpu.memory_space<vmem>>, vector<24x128xf32>
    tpu.vector_store %arg4[%c0_13, %c0_14], %53 {strides = array<i32>} : memref<24x128xf32, #tpu.memory_space<vmem>>, vector<24x128xf32>,
    return
  }
  func.func @transform_0(%arg0: i32) -> (i32, i32) {
    %c0_i32 = arith.constant 0 : i32
    %c0_i32_0 = arith.constant 0 : i32
    %c0_i32_1 = arith.constant 0 : i32
    return %c0_i32, %c0_i32_0 : i32, i32
  }
  func.func @transform_1(%arg0: i32) -> (i32, i32) {
    %c0_i32 = arith.constant 0 : i32
    %c0_i32_0 = arith.constant 0 : i32
    %c0_i32_1 = arith.constant 0 : i32
    return %c0_i32, %c0_i32_0 : i32, i32
  }
  func.func @transform_2(%arg0: i32) -> (i32, i32) {
    %c0_i32 = arith.constant 0 : i32
    %c0_i32_0 = arith.constant 0 : i32
    return %c0_i32, %arg0 : i32, i32
  }
  func.func @transform_3(%arg0: i32) -> (i32, i32) {
    %c0_i32 = arith.constant 0 : i32
    %c0_i32_0 = arith.constant 0 : i32
    return %c0_i32, %arg0 : i32, i32
  }
}

</mosaic_0001>

<llo_original>
// kernel: tpu_custom_call.1
$region0: #{tpu_custom_call.1}
  #allocation0 [shape = 'u32[]', space=smem, size = 0x4, offset = 0x4, fixed_abs, tag = 'smem constant byte address 0x4 - core index']
  #allocation1 [shape = 'u32[144,128]{1,0:T(1,128)}', space=vmem, size = 0x12000, scoped, tag = 'internal scratch']
  %s0 = inlined_call_operand.vmem [shape: f32[24,8], index: 0, kind: input, shape index: {}]
  %s1 = inlined_call_operand.vmem [shape: f32[24,1], index: 1, kind: input, shape index: {}]
  %s2 = inlined_call_operand.vmem [shape: f32[24,128], index: 2, kind: input, shape index: {}]
  %s3 = inlined_call_operand.hbm [shape: f32[24,128], index: 3, kind: output, shape index: {}]
  %s4 = sld [smem:[#allocation0]]
  $region22: #{tpu_custom_call.1} parent=0
    _
  %s6 = ssub.s32 1, %s4
  %s7 = scalar_select 0, %s6, %s4
  $region1: #{tpu_custom_call.1} parent=0
    #allocation2 [shape = 'u8[12288]{0}', space=vmem, size = 0x3000, scoped, tag = 'output window, operand 0, single buffered']
    #allocation3 [shape = 's32[1]{0}', space=sflag, size = 0x4, scoped, tag = 'scoped memory for tpu_custom_call.1']
    %8 = vsyncpa [#allocation3], 0
    // Predicated region
    $region2: #{tpu_custom_call.1} parent=1 // pred_check
      _
    $region3: #{tpu_custom_call.1} parent=1 // pred_check_branch
      %10 = sbr.rel (0) target = $region5
    $region4: #{tpu_custom_call.1} parent=1 // pred_region
      _
    $region5: #{tpu_custom_call.1} parent=1 // pred_fallthru
      _
    // Predicated region
    $region6: #{tpu_custom_call.1} parent=1 // pred_check
      _
    $region7: #{tpu_custom_call.1} parent=1 // pred_check_branch
      %12 = sbr.rel (0) target = $region9
    $region8: #{tpu_custom_call.1} parent=1 // pred_region
      _
    $region9: #{tpu_custom_call.1} parent=1 // pred_fallthru
      _
    // Predicated region
    $region10: #{tpu_custom_call.1} parent=1 // pred_check
      _
    $region11: #{tpu_custom_call.1} parent=1 // pred_check_branch
      %14 = sbr.rel (0) target = $region13
    $region12: #{tpu_custom_call.1} parent=1 // pred_region
      _
    $region13: #{tpu_custom_call.1} parent=1 // pred_fallthru
      _
    %v15 = vld [vmem:[%s2] sm:$0xff]
    %v16 = vld [vmem:[%s2 + $0x8] sm:$0xff]
    %v17 = vld [vmem:[%s2 + $0x10] sm:$0xff]
    %v18 = vmax.f32 %v15, 0.0
    %v19 = vmax.f32 %v16, 0.0
    %v20 = vmax.f32 %v17, 0.0
    %v21 = vmin.f32 %v18, 1.0
    %v22 = vmin.f32 %v19, 1.0
    %v23 = vmin.f32 %v20, 1.0
    %v24 = vld [vmem:[%s0] sm:$0xff]
    %v25 = vld [vmem:[%s0 + $0x8] sm:$0xff]
    %v26 = vld [vmem:[%s0 + $0x10] sm:$0xff]
    %v27 = vld [vmem:[%s1] sm:$0xff]
    %v28 = vld [vmem:[%s1 + $0x8] sm:$0xff]
    %v29 = vld [vmem:[%s1 + $0x10] sm:$0xff]
    %31 = vset.pattern.permute.xlu0 0
    %32 = vperm.xlu0 %31, %v24
    %v33 = vpop.permute.xlu0 %32
    %36 = vset.pattern.permute.xlu0 0
    %37 = vperm.xlu0 %36, %v25
    %v38 = vpop.permute.xlu0 %37
    %41 = vset.pattern.permute.xlu0 0
    %42 = vperm.xlu0 %41, %v26
    %v43 = vpop.permute.xlu0 %42
    %v45 = vmul.f32 %v33, %v21
    %v46 = vmul.f32 %v38, %v22
    %v47 = vmul.f32 %v43, %v23
    %49 = vset.pattern.permute.xlu0 0
    %50 = vperm.xlu0 %49, %v27
    %v51 = vpop.permute.xlu0 %50
    %54 = vset.pattern.permute.xlu0 0
    %55 = vperm.xlu0 %54, %v28
    %v56 = vpop.permute.xlu0 %55
    %59 = vset.pattern.permute.xlu0 0
    %60 = vperm.xlu0 %59, %v29
    %v61 = vpop.permute.xlu0 %60
    %v63 = vadd.f32 %v51, %v45
    %v64 = vadd.f32 %v56, %v46
    %v65 = vadd.f32 %v61, %v47
    %v66 = vmax.f32 %v21, 0.125
    %v67 = vmax.f32 %v22, 0.125
    %v68 = vmax.f32 %v23, 0.125
    %69 = vset.pattern.permute.xlu0 1
    %70 = vperm.xlu0 %69, %v24
    %v71 = vpop.permute.xlu0 %70
    %73 = vset.pattern.permute.xlu0 1
    %74 = vperm.xlu0 %73, %v25
    %v75 = vpop.permute.xlu0 %74
    %77 = vset.pattern.permute.xlu0 1
    %78 = vperm.xlu0 %77, %v26
    %v79 = vpop.permute.xlu0 %78
    %v81 = vmul.f32 %v71, %v66
    %v82 = vmul.f32 %v75, %v67
    %v83 = vmul.f32 %v79, %v68
    %v84 = vadd.f32 %v63, %v81
    %v85 = vadd.f32 %v64, %v82
    %v86 = vadd.f32 %v65, %v83
    %v87 = vmax.f32 %v21, 0.25
    %v88 = vmax.f32 %v22, 0.25
    %v89 = vmax.f32 %v23, 0.25
    %90 = vset.pattern.permute.xlu0 2
    %91 = vperm.xlu0 %90, %v24
    %v92 = vpop.permute.xlu0 %91
    %94 = vset.pattern.permute.xlu0 2
    %95 = vperm.xlu0 %94, %v25
    %v96 = vpop.permute.xlu0 %95
    %98 = vset.pattern.permute.xlu0 2
    %99 = vperm.xlu0 %98, %v26
    %v100 = vpop.permute.xlu0 %99
    %v102 = vmul.f32 %v92, %v87
    %v103 = vmul.f32 %v96, %v88
    %v104 = vmul.f32 %v100, %v89
    %v105 = vadd.f32 %v84, %v102
    %v106 = vadd.f32 %v85, %v103
    %v107 = vadd.f32 %v86, %v104
    %v108 = vmax.f32 %v21, 0.375
    %v109 = vmax.f32 %v22, 0.375
    %v110 = vmax.f32 %v23, 0.375
    %111 = vset.pattern.permute.xlu0 3
    %112 = vperm.xlu0 %111, %v24
    %v113 = vpop.permute.xlu0 %112
    %115 = vset.pattern.permute.xlu0 3
    %116 = vperm.xlu0 %115, %v25
    %v117 = vpop.permute.xlu0 %116
    %119 = vset.pattern.permute.xlu0 3
    %120 = vperm.xlu0 %119, %v26
    %v121 = vpop.permute.xlu0 %120
    %v123 = vmul.f32 %v113, %v108
    %v124 = vmul.f32 %v117, %v109
    %v125 = vmul.f32 %v121, %v110
    %v126 = vadd.f32 %v105, %v123
    %v127 = vadd.f32 %v106, %v124
    %v128 = vadd.f32 %v107, %v125
    %v129 = vmax.f32 %v21, 0.5
    %v130 = vmax.f32 %v22, 0.5
    %v131 = vmax.f32 %v23, 0.5
    %132 = vset.pattern.permute.xlu0 4
    %133 = vperm.xlu0 %132, %v24
    %v134 = vpop.permute.xlu0 %133
    %136 = vset.pattern.permute.xlu0 4
    %137 = vperm.xlu0 %136, %v25
    %v138 = vpop.permute.xlu0 %137
    %140 = vset.pattern.permute.xlu0 4
    %141 = vperm.xlu0 %140, %v26
    %v142 = vpop.permute.xlu0 %141
    %v144 = vmul.f32 %v134, %v129
    %v145 = vmul.f32 %v138, %v130
    %v146 = vmul.f32 %v142, %v131
    %v147 = vadd.f32 %v126, %v144
    %v148 = vadd.f32 %v127, %v145
    %v149 = vadd.f32 %v128, %v146
    %v150 = vmax.f32 %v21, 0.625
    %v151 = vmax.f32 %v22, 0.625
    %v152 = vmax.f32 %v23, 0.625
    %153 = vset.pattern.permute.xlu0 5
    %154 = vperm.xlu0 %153, %v24
    %v155 = vpop.permute.xlu0 %154
    %157 = vset.pattern.permute.xlu0 5
    %158 = vperm.xlu0 %157, %v25
    %v159 = vpop.permute.xlu0 %158
    %161 = vset.pattern.permute.xlu0 5
    %162 = vperm.xlu0 %161, %v26
    %v163 = vpop.permute.xlu0 %162
    %v165 = vmul.f32 %v155, %v150
    %v166 = vmul.f32 %v159, %v151
    %v167 = vmul.f32 %v163, %v152
    %v168 = vadd.f32 %v147, %v165
    %v169 = vadd.f32 %v148, %v166
    %v170 = vadd.f32 %v149, %v167
    %v171 = vmax.f32 %v21, 0.75
    %v172 = vmax.f32 %v22, 0.75
    %v173 = vmax.f32 %v23, 0.75
    %174 = vset.pattern.permute.xlu0 6
    %175 = vperm.xlu0 %174, %v24
    %v176 = vpop.permute.xlu0 %175
    %178 = vset.pattern.permute.xlu0 6
    %179 = vperm.xlu0 %178, %v25
    %v180 = vpop.permute.xlu0 %179
    %182 = vset.pattern.permute.xlu0 6
    %183 = vperm.xlu0 %182, %v26
    %v184 = vpop.permute.xlu0 %183
    %v186 = vmul.f32 %v176, %v171
    %v187 = vmul.f32 %v180, %v172
    %v188 = vmul.f32 %v184, %v173
    %v189 = vadd.f32 %v168, %v186
    %v190 = vadd.f32 %v169, %v187
    %v191 = vadd.f32 %v170, %v188
    %v192 = vmax.f32 %v21, 0.875
    %v193 = vmax.f32 %v22, 0.875
    %v194 = vmax.f32 %v23, 0.875
    %195 = vset.pattern.permute.xlu0 7
    %196 = vperm.xlu0 %195, %v24
    %v197 = vpop.permute.xlu0 %196
    %199 = vset.pattern.permute.xlu0 7
    %200 = vperm.xlu0 %199, %v25
    %v201 = vpop.permute.xlu0 %200
    %203 = vset.pattern.permute.xlu0 7
    %204 = vperm.xlu0 %203, %v26
    %v205 = vpop.permute.xlu0 %204
    %v207 = vmul.f32 %v197, %v192
    %v208 = vmul.f32 %v201, %v193
    %v209 = vmul.f32 %v205, %v194
    %v210 = vadd.f32 %v189, %v207
    %v211 = vadd.f32 %v190, %v208
    %v212 = vadd.f32 %v191, %v209
    %213 = vst [vmem:[#allocation2] sm:$0xff] %v210
    %214 = vst [vmem:[#allocation2 + $0x8] sm:$0xff] %v211
    %215 = vst [vmem:[#allocation2 + $0x10] sm:$0xff] %v212
    // Predicated region
    $region14: #{tpu_custom_call.1} parent=1 // pred_check
      _
    $region15: #{tpu_custom_call.1} parent=1 // pred_check_branch
      %217 = sbr.rel (0) target = $region17
    $region16: #{tpu_custom_call.1} parent=1 // pred_region
      %s219 = ssub.s32 384, 384
      %220 = vsyncadd [#allocation3], %s219
      %s221 = sshll.u32 [#allocation2], 4
      %s222 = int_to_ptr.vmem [resolvable:$true] %s221
      %227 = dma.vmem_to_hbm [thread:$0]  %s222, 384, %s3, [#allocation3], 128, 128, 8
    $region17: #{tpu_custom_call.1} parent=1 // pred_fallthru
      _
    // Predicated region
    $region18: #{tpu_custom_call.1} parent=1 // pred_check
      _
    $region19: #{tpu_custom_call.1} parent=1 // pred_check_branch
      %229 = sbr.rel (0) target = $region21
    $region20: #{tpu_custom_call.1} parent=1 // pred_region
      %230 = dma.done [#allocation3], 384
    $region21: #{tpu_custom_call.1} parent=1 // pred_fallthru
      _
    %231 = vsyncpa [#allocation3], 1

</llo_original>
